<compile_context>
chip_gen: v7x
topology: tpu7x:2x2x1
jax: 0.10.0
libtpu: 0.0.40
codegen_flags: <defaults>
</compile_context>

<pallas_src>
import jax
import jax.numpy as jnp
from jax.experimental import pallas as pl
from jax.experimental.pallas import tpu as pltpu

# Small, deterministic problem sizes consistent with the module.
N, CIN, H, W = 2, 4, 16, 16
COUT = 8
KH = KW = 3
NB_HIDDEN = 50
HID_PAD = 128                            # hidden dim zero-padded to a lane multiple
N_CLASSES = 2
PH, PW = H // 2, W // 2                  # pooled spatial dims (8, 8)
NUM_FEATURES = COUT * PH * PW            # 512, matches torch x.view(-1, num_features)
PIX = N * PH * PW                        # 128 pooled pixels per pool-offset block
NTAP = KH * KW * CIN                     # 36 = im2col contraction depth


def fused_forward_kernel(xim_ref, wct_ref, bc_ref, w1_ref, b1_ref, w2_ref, b2_ref,
                         o_ref):
    """Whole forward pass in one invocation (everything resident in VMEM).

    xim_ref: (NTAP, 4*PIX) = (36, 512) lane-dense im2col input.
             Rows: (kh, kw, cin).  Columns: (i, j, n, ph, pw) where (i, j) is the
             position inside the 2x2 max-pool window, so the four 128-wide
             column blocks are the four pool offsets.
    wct_ref: (COUT, NTAP) conv weights, bc_ref: (COUT, 1) conv bias
    w1_ref : (NUM_FEATURES, HID_PAD), b1_ref: (1, HID_PAD)   (zero-padded 50->128)
    w2_ref : (HID_PAD, N_CLASSES),    b2_ref: (1, N_CLASSES) (padded rows are zero)
    o_ref  : (N, N_CLASSES)
    """
    # ---- Conv2d(3x3, pad=1) + bias + ReLU: single (8,36)x(36,512) contraction
    y = jnp.dot(wct_ref[...], xim_ref[...], preferred_element_type=jnp.float32)
    y = jnp.maximum(y + bc_ref[...], 0.0)                       # (COUT, 4*PIX)

    # ---- MaxPool2d(2): elementwise max over the four 128-aligned blocks -----
    pooled = jnp.maximum(
        jnp.maximum(y[:, 0 * PIX:1 * PIX], y[:, 1 * PIX:2 * PIX]),
        jnp.maximum(y[:, 2 * PIX:3 * PIX], y[:, 3 * PIX:4 * PIX]))  # (COUT, N*PH*PW)

    # ---- Flatten in torch NCHW view order: flat[n, c*64 + ph*8 + pw] ---------
    # pooled[c, n*64 + p] -> flat[n, c*64 + p]; only ~1 vreg of data total.
    rows = []
    for n in range(N):
        rows.append(jnp.concatenate(
            [pooled[c:c + 1, n * PH * PW:(n + 1) * PH * PW] for c in range(COUT)],
            axis=1))                                            # (1, 512)
    flat = jnp.concatenate(rows, axis=0)                        # (N, 512)

    # ---- classifier: Linear -> ReLU -> Dropout(eval: identity) -> Linear ----
    h = jnp.dot(flat, w1_ref[...], preferred_element_type=jnp.float32) + b1_ref[...]
    h = jnp.maximum(h, 0.0)                                     # (N, HID_PAD), pads stay 0
    # Dropout(p=0.1) is identity in eval/inference mode.
    o_ref[...] = (jnp.dot(h, w2_ref[...], preferred_element_type=jnp.float32)
                  + b2_ref[...])


_FLOPS = 2 * COUT * NTAP * 4 * PIX + 2 * N * NUM_FEATURES * HID_PAD \
         + 2 * N * HID_PAD * N_CLASSES
_BYTES = 4 * (NTAP * 4 * PIX + COUT * NTAP + COUT
              + NUM_FEATURES * HID_PAD + HID_PAD
              + HID_PAD * N_CLASSES + N_CLASSES + N * N_CLASSES)


@jax.jit
def model_forward(x_nchw, kparams):
    wct, bc, w1, b1, w2, b2 = kparams
    # Single tiny host-side prep fusion (~73 KB): build the lane-dense im2col
    # tensor so the kernel body is just one conv matmul + pool max + classifier.
    x = jnp.transpose(x_nchw, (0, 2, 3, 1))                     # (N, H, W, CIN)
    xpad = jnp.pad(x, ((0, 0), (1, 1), (1, 1), (0, 0)))         # (N, H+2, W+2, CIN)
    # patches[n, oh, ow, kh, kw, c] = xpad[n, oh+kh, ow+kw, c]
    patches = jnp.stack(
        [jnp.stack([xpad[:, kh:kh + H, kw:kw + W, :] for kw in range(KW)], axis=3)
         for kh in range(KH)], axis=3)                          # (N, H, W, KH, KW, CIN)
    p6 = patches.reshape(N, PH, 2, PW, 2, KH, KW, CIN)          # oh=2*ph+i, ow=2*pw+j
    xim = jnp.transpose(p6, (5, 6, 7, 2, 4, 0, 1, 3))           # (kh,kw,c, i,j, n,ph,pw)
    xim = xim.reshape(NTAP, 4 * PIX)                            # (36, 512)

    vmem = pl.BlockSpec(memory_space=pltpu.MemorySpace.VMEM)    # whole array in VMEM
    return pl.pallas_call(
        fused_forward_kernel,
        out_shape=jax.ShapeDtypeStruct((N, N_CLASSES), jnp.float32),
        in_specs=[vmem] * 7,
        out_specs=pl.BlockSpec(memory_space=pltpu.MemorySpace.VMEM),
        cost_estimate=pl.CostEstimate(flops=_FLOPS, transcendentals=0,
                                      bytes_accessed=_BYTES),
    )(xim, wct, bc, w1, b1, w2, b2)


def init_params(key):
    """Parameters in PyTorch layouts: Conv2d OIHW + (O,), Linear (out,in) + (out,)."""
    k = jax.random.split(key, 6)
    w_conv = jax.random.normal(k[0], (COUT, CIN, KH, KW), jnp.float32) * 0.1
    b_conv = jax.random.normal(k[1], (COUT,), jnp.float32) * 0.01
    w1 = jax.random.normal(k[2], (NB_HIDDEN, NUM_FEATURES), jnp.float32) * 0.05
    b1 = jax.random.normal(k[3], (NB_HIDDEN,), jnp.float32) * 0.01
    w2 = jax.random.normal(k[4], (N_CLASSES, NB_HIDDEN), jnp.float32) * 0.1
    b2 = jax.random.normal(k[5], (N_CLASSES,), jnp.float32) * 0.01
    return (w_conv, b_conv, w1, b1, w2, b2)


def prepare_params(params):
    """One-time host-side re-layout of the PyTorch weights into kernel form."""
    w_conv, b_conv, w1, b1, w2, b2 = params
    # OIHW -> (COUT, 36) with column order (kh, kw, cin), matching xim rows.
    wct = jnp.transpose(w_conv, (0, 2, 3, 1)).reshape(COUT, NTAP)
    bc = b_conv.reshape(COUT, 1)
    # torch Linear: h = x @ W^T + b.  Zero-pad hidden 50 -> 128 lanes; the padded
    # b1 entries and w2 rows are exactly zero so padded units contribute nothing.
    w1p = jnp.zeros((NUM_FEATURES, HID_PAD), jnp.float32).at[:, :NB_HIDDEN].set(w1.T)
    b1p = jnp.zeros((1, HID_PAD), jnp.float32).at[:, :NB_HIDDEN].set(b1)
    w2p = jnp.zeros((HID_PAD, N_CLASSES), jnp.float32).at[:NB_HIDDEN, :].set(w2.T)
    b2p = b2.reshape(1, N_CLASSES)
    return (wct, bc, w1p, b1p, w2p, b2p)


if __name__ == "__main__":
    key = jax.random.PRNGKey(0)
    kx, kp = jax.random.split(key)
    x = jax.random.normal(kx, (N, CIN, H, W), jnp.float32)   # NCHW like torch
    params = init_params(kp)
    kparams = prepare_params(params)                          # one-time re-layout
    out = model_forward(x, kparams)
    jax.block_until_ready(out)
    assert out.shape == (N, N_CLASSES) and out.dtype == jnp.float32
    print("KERNEL_OK")
</pallas_src>

<mosaic_0001>
module attributes {stable_mosaic.version = 11 : i64} {
  func.func @fused_forward_kernel(%arg0: memref<36x512xf32, #tpu.memory_space<vmem>>, %arg1: memref<8x36xf32, #tpu.memory_space<vmem>>, %arg2: memref<8x1xf32, #tpu.memory_space<vmem>>, %arg3: memref<512x128xf32, #tpu.memory_space<vmem>>, %arg4: memref<1x128xf32, #tpu.memory_space<vmem>>, %arg5: memref<128x2xf32, #tpu.memory_space<vmem>>, %arg6: memref<1x2xf32, #tpu.memory_space<vmem>>, %arg7: memref<2x2xf32, #tpu.memory_space<vmem>>) attributes {dimension_semantics = [], scalar_prefetch = 0 : i64, scratch_operands = 0 : i64, tpu.core_type = #tpu.core_type<tc>} {
    %c0 = arith.constant 0 : index
    %c0_0 = arith.constant 0 : index
    %0 = vector.load %arg1[%c0, %c0_0] : memref<8x36xf32, #tpu.memory_space<vmem>>, vector<8x36xf32>
    %c0_1 = arith.constant 0 : index
    %c0_2 = arith.constant 0 : index
    %1 = vector.load %arg0[%c0_1, %c0_2] : memref<36x512xf32, #tpu.memory_space<vmem>>, vector<36x512xf32>
    %cst = arith.constant dense<0.000000e+00> : vector<8x512xf32>
    %2 = tpu.matmul %0, %1, %cst {dimension_numbers = #tpu.dot_dimension_numbers<[1], [0], [0], [1], [0, 0, 1, 1], [], []>} : vector<8x36xf32>, vector<36x512xf32>, vector<8x512xf32> -> vector<8x512xf32>
    %c0_3 = arith.constant 0 : index
    %c0_4 = arith.constant 0 : index
    %3 = vector.load %arg2[%c0_3, %c0_4] : memref<8x1xf32, #tpu.memory_space<vmem>>, vector<8x1xf32>
    %4 = vector.broadcast %3 : vector<8x1xf32> to vector<8x512xf32>
    %5 = arith.addf %2, %4 : vector<8x512xf32>
    %cst_5 = arith.constant 0.000000e+00 : f32
    %6 = vector.broadcast %cst_5 : f32 to vector<8x512xf32>
    %7 = arith.maximumf %5, %6 : vector<8x512xf32>
    %8 = vector.extract_strided_slice %7 {offsets = [0, 0], sizes = [8, 128], strides = [1, 1]} : vector<8x512xf32> to vector<8x128xf32>
    %9 = vector.extract_strided_slice %7 {offsets = [0, 128], sizes = [8, 128], strides = [1, 1]} : vector<8x512xf32> to vector<8x128xf32>
    %10 = arith.maximumf %8, %9 : vector<8x128xf32>
    %11 = vector.extract_strided_slice %7 {offsets = [0, 256], sizes = [8, 128], strides = [1, 1]} : vector<8x512xf32> to vector<8x128xf32>
    %12 = vector.extract_strided_slice %7 {offsets = [0, 384], sizes = [8, 128], strides = [1, 1]} : vector<8x512xf32> to vector<8x128xf32>
    %13 = arith.maximumf %11, %12 : vector<8x128xf32>
    %14 = arith.maximumf %10, %13 : vector<8x128xf32>
    %15 = vector.extract_strided_slice %14 {offsets = [0, 0], sizes = [1, 64], strides = [1, 1]} : vector<8x128xf32> to vector<1x64xf32>
    %16 = vector.extract_strided_slice %14 {offsets = [1, 0], sizes = [1, 64], strides = [1, 1]} : vector<8x128xf32> to vector<1x64xf32>
    %17 = vector.extract_strided_slice %14 {offsets = [2, 0], sizes = [1, 64], strides = [1, 1]} : vector<8x128xf32> to vector<1x64xf32>
    %18 = vector.extract_strided_slice %14 {offsets = [3, 0], sizes = [1, 64], strides = [1, 1]} : vector<8x128xf32> to vector<1x64xf32>
    %19 = vector.extract_strided_slice %14 {offsets = [4, 0], sizes = [1, 64], strides = [1, 1]} : vector<8x128xf32> to vector<1x64xf32>
    %20 = vector.extract_strided_slice %14 {offsets = [5, 0], sizes = [1, 64], strides = [1, 1]} : vector<8x128xf32> to vector<1x64xf32>
    %21 = vector.extract_strided_slice %14 {offsets = [6, 0], sizes = [1, 64], strides = [1, 1]} : vector<8x128xf32> to vector<1x64xf32>
    %22 = vector.extract_strided_slice %14 {offsets = [7, 0], sizes = [1, 64], strides = [1, 1]} : vector<8x128xf32> to vector<1x64xf32>
    %23 = tpu.concatenate %15, %16, %17, %18, %19, %20, %21, %22 in 1 : vector<1x64xf32>, vector<1x64xf32>, vector<1x64xf32>, vector<1x64xf32>, vector<1x64xf32>, vector<1x64xf32>, vector<1x64xf32>, vector<1x64xf32> -> vector<1x512xf32>
    %24 = vector.extract_strided_slice %14 {offsets = [0, 64], sizes = [1, 64], strides = [1, 1]} : vector<8x128xf32> to vector<1x64xf32>
    %25 = vector.extract_strided_slice %14 {offsets = [1, 64], sizes = [1, 64], strides = [1, 1]} : vector<8x128xf32> to vector<1x64xf32>
    %26 = vector.extract_strided_slice %14 {offsets = [2, 64], sizes = [1, 64], strides = [1, 1]} : vector<8x128xf32> to vector<1x64xf32>
    %27 = vector.extract_strided_slice %14 {offsets = [3, 64], sizes = [1, 64], strides = [1, 1]} : vector<8x128xf32> to vector<1x64xf32>
    %28 = vector.extract_strided_slice %14 {offsets = [4, 64], sizes = [1, 64], strides = [1, 1]} : vector<8x128xf32> to vector<1x64xf32>
    %29 = vector.extract_strided_slice %14 {offsets = [5, 64], sizes = [1, 64], strides = [1, 1]} : vector<8x128xf32> to vector<1x64xf32>
    %30 = vector.extract_strided_slice %14 {offsets = [6, 64], sizes = [1, 64], strides = [1, 1]} : vector<8x128xf32> to vector<1x64xf32>
    %31 = vector.extract_strided_slice %14 {offsets = [7, 64], sizes = [1, 64], strides = [1, 1]} : vector<8x128xf32> to vector<1x64xf32>
    %32 = tpu.concatenate %24, %25, %26, %27, %28, %29, %30, %31 in 1 : vector<1x64xf32>, vector<1x64xf32>, vector<1x64xf32>, vector<1x64xf32>, vector<1x64xf32>, vector<1x64xf32>, vector<1x64xf32>, vector<1x64xf32> -> vector<1x512xf32>
    %33 = tpu.concatenate %23, %32 in 0 : vector<1x512xf32>, vector<1x512xf32> -> vector<2x512xf32>
    %c0_6 = arith.constant 0 : index
    %c0_7 = arith.constant 0 : index
    %34 = vector.load %arg3[%c0_6, %c0_7] : memref<512x128xf32, #tpu.memory_space<vmem>>, vector<512x128xf32>
    %cst_8 = arith.constant dense<0.000000e+00> : vector<2x128xf32>
    %35 = tpu.matmul %33, %34, %cst_8 {dimension_numbers = #tpu.dot_dimension_numbers<[1], [0], [0], [1], [0, 0, 1, 1], [], []>} : vector<2x512xf32>, vector<512x128xf32>, vector<2x128xf32> -> vector<2x128xf32>
    %c0_9 = arith.constant 0 : index
    %c0_10 = arith.constant 0 : index
    %36 = vector.load %arg4[%c0_9, %c0_10] : memref<1x128xf32, #tpu.memory_space<vmem>>, vector<1x128xf32>
    %37 = vector.broadcast %36 : vector<1x128xf32> to vector<2x128xf32>
    %38 = arith.addf %35, %37 : vector<2x128xf32>
    %cst_11 = arith.constant 0.000000e+00 : f32
    %39 = vector.broadcast %cst_11 : f32 to vector<2x128xf32>
    %40 = arith.maximumf %38, %39 : vector<2x128xf32>
    %c0_12 = arith.constant 0 : index
    %c0_13 = arith.constant 0 : index
    %41 = vector.load %arg5[%c0_12, %c0_13] : memref<128x2xf32, #tpu.memory_space<vmem>>, vector<128x2xf32>
    %cst_14 = arith.constant dense<0.000000e+00> : vector<2x2xf32>
    %42 = tpu.matmul %40, %41, %cst_14 {dimension_numbers = #tpu.dot_dimension_numbers<[1], [0], [0], [1], [0, 0, 1, 1], [], []>} : vector<2x128xf32>, vector<128x2xf32>, vector<2x2xf32> -> vector<2x2xf32>
    %c0_15 = arith.constant 0 : index
    %c0_16 = arith.constant 0 : index
    %43 = vector.load %arg6[%c0_15, %c0_16] : memref<1x2xf32, #tpu.memory_space<vmem>>, vector<1x2xf32>
    %44 = vector.broadcast %43 : vector<1x2xf32> to vector<2x2xf32>
    %45 = arith.addf %42, %44 : vector<2x2xf32>
    %c0_17 = arith.constant 0 : index
    %c0_18 = arith.constant 0 : index
    %46 = vector.load %arg7[%c0_17, %c0_18] : memref<2x2xf32, #tpu.memory_space<vmem>>, vector<2x2xf32>
    tpu.vector_store %arg7[%c0_17, %c0_18], %45 {strides = array<i32>} : memref<2x2xf32, #tpu.memory_space<vmem>>, vector<2x2xf32>,
    return
  }
}

</mosaic_0001>

<llo_original>
// kernel: model_forward.1
$region0: #{model_forward.1}
  #allocation0 [shape = 'u32[]', space=smem, size = 0x4, offset = 0x4, fixed_abs, tag = 'smem constant byte address 0x4 - core index']
  #allocation1 [shape = 'u32[144,128]{1,0:T(1,128)}', space=vmem, size = 0x12000, scoped, tag = 'internal scratch']
  %s0 = inlined_call_operand.vmem [shape: f32[36,512], index: 0, kind: input, shape index: {}]
  %s1 = inlined_call_operand.vmem [shape: f32[8,36], index: 1, kind: input, shape index: {}]
  %s2 = inlined_call_operand.vmem [shape: f32[8,1], index: 2, kind: input, shape index: {}]
  %s3 = inlined_call_operand.vmem [shape: f32[512,128], index: 3, kind: input, shape index: {}]
  %s4 = inlined_call_operand.vmem [shape: f32[1,128], index: 4, kind: input, shape index: {}]
  %s5 = inlined_call_operand.vmem [shape: f32[128,2], index: 5, kind: input, shape index: {}]
  %s6 = inlined_call_operand.vmem [shape: f32[1,2], index: 6, kind: input, shape index: {}]
  %s7 = inlined_call_operand.hbm [shape: f32[2,2], index: 7, kind: output, shape index: {}]
  %s8 = sld [smem:[#allocation0]]
  $region38: #{model_forward.1} parent=0
    _
  %s10 = ssub.s32 1, %s8
  %s11 = scalar_select 0, %s10, %s8
  $region1: #{model_forward.1} parent=0
    #allocation2 [shape = 'u8[1024]{0}', space=vmem, size = 0x400, scoped, tag = 'output window, operand 0, single buffered']
    #allocation3 [shape = 's32[1]{0}', space=sflag, size = 0x4, scoped, tag = 'scoped memory for model_forward.1']
    %12 = vsyncpa [#allocation3], 0
    // Predicated region
    $region2: #{model_forward.1} parent=1 // pred_check
      _
    $region3: #{model_forward.1} parent=1 // pred_check_branch
      %14 = sbr.rel (0) target = $region5
    $region4: #{model_forward.1} parent=1 // pred_region
      _
    $region5: #{model_forward.1} parent=1 // pred_fallthru
      _
    // Predicated region
    $region6: #{model_forward.1} parent=1 // pred_check
      _
    $region7: #{model_forward.1} parent=1 // pred_check_branch
      %16 = sbr.rel (0) target = $region9
    $region8: #{model_forward.1} parent=1 // pred_region
      _
    $region9: #{model_forward.1} parent=1 // pred_fallthru
      _
    // Predicated region
    $region10: #{model_forward.1} parent=1 // pred_check
      _
    $region11: #{model_forward.1} parent=1 // pred_check_branch
      %18 = sbr.rel (0) target = $region13
    $region12: #{model_forward.1} parent=1 // pred_region
      _
    $region13: #{model_forward.1} parent=1 // pred_fallthru
      _
    // Predicated region
    $region14: #{model_forward.1} parent=1 // pred_check
      _
    $region15: #{model_forward.1} parent=1 // pred_check_branch
      %20 = sbr.rel (0) target = $region17
    $region16: #{model_forward.1} parent=1 // pred_region
      _
    $region17: #{model_forward.1} parent=1 // pred_fallthru
      _
    // Predicated region
    $region18: #{model_forward.1} parent=1 // pred_check
      _
    $region19: #{model_forward.1} parent=1 // pred_check_branch
      %22 = sbr.rel (0) target = $region21
    $region20: #{model_forward.1} parent=1 // pred_region
      _
    $region21: #{model_forward.1} parent=1 // pred_fallthru
      _
    // Predicated region
    $region22: #{model_forward.1} parent=1 // pred_check
      _
    $region23: #{model_forward.1} parent=1 // pred_check_branch
      %24 = sbr.rel (0) target = $region25
    $region24: #{model_forward.1} parent=1 // pred_region
      _
    $region25: #{model_forward.1} parent=1 // pred_fallthru
      _
    // Predicated region
    $region26: #{model_forward.1} parent=1 // pred_check
      _
    $region27: #{model_forward.1} parent=1 // pred_check_branch
      %26 = sbr.rel (0) target = $region29
    $region28: #{model_forward.1} parent=1 // pred_region
      _
    $region29: #{model_forward.1} parent=1 // pred_fallthru
      _
    %v27 = vld [vmem:[%s1] sm:$0xff]
    %v28 = vld [vmem:[%s0] sm:$0xff]
    %v29 = vld [vmem:[%s0 + $0x8] sm:$0xff]
    %v30 = vld [vmem:[%s0 + $0x10] sm:$0xff]
    %v31 = vld [vmem:[%s0 + $0x18] sm:$0xff]
    %v32 = vld [vmem:[%s0 + $0x20] sm:$0xff]
    %v33 = vld [vmem:[%s0 + $0x28] sm:$0xff]
    %v34 = vld [vmem:[%s0 + $0x30] sm:$0xff]
    %v35 = vld [vmem:[%s0 + $0x38] sm:$0xff]
    %v36 = vld [vmem:[%s0 + $0x40] sm:$0xff]
    %v37 = vld [vmem:[%s0 + $0x48] sm:$0xff]
    %v38 = vld [vmem:[%s0 + $0x50] sm:$0xff]
    %v39 = vld [vmem:[%s0 + $0x58] sm:$0xff]
    %v40 = vld [vmem:[%s0 + $0x60] sm:$0xff]
    %v41 = vld [vmem:[%s0 + $0x68] sm:$0xff]
    %v42 = vld [vmem:[%s0 + $0x70] sm:$0xff]
    %v43 = vld [vmem:[%s0 + $0x78] sm:$0xff]
    %v44 = vld [vmem:[%s0 + $0x80] sm:$0xf]
    %v45 = vld [vmem:[%s0 + $0x88] sm:$0xf]
    %v46 = vld [vmem:[%s0 + $0x90] sm:$0xf]
    %v47 = vld [vmem:[%s0 + $0x98] sm:$0xf]
    %v48 = vld [vmem:[%s2] sm:$0xff]
    %50 = vset.pattern.permute.xlu0 0
    %51 = vperm.xlu0 %50, %v48
    %v52 = vpop.permute.xlu0 %51
    %vm54 = vcmask 293888
    %v56 = vsel %vm54, %v27, 0
    %vm58 = vcmask 1043456
    %v60 = vsel %vm58, %v44, 0
    %v63 = vsel %vm58, %v45, 0
    %v66 = vsel %vm58, %v46, 0
    %v69 = vsel %vm58, %v47, 0
    %71 = vmatprep.subr.mxu0 %v29
    %72 = vmatpush1.msra.mxu0 %v28
    %73 = vmatprep.subr.mxu0 %v33
    %74 = vmatpush1.msra.mxu0 %v32
    %75 = vmatprep.subr.mxu0 %v37
    %76 = vmatpush1.msra.mxu0 %v36
    %77 = vmatprep.subr.mxu0 %v41
    %78 = vmatpush1.msra.mxu0 %v40
    %79 = vmatprep.subr.mxu0 %v63
    %80 = vmatpush1.msra.mxu0 %v60
    %81 = vmatprep.subr.mxu0 0.0
    %82 = vmatpush1.msra.mxu0 0.0
    %83 = vmatprep.subr.mxu0 0.0
    %84 = vmatpush1.msra.mxu0 0.0
    %85 = vmatprep.subr.mxu0 0.0
    %86 = vmatpush1.msra.mxu0 0.0
    %87 = vmatprep.subr.mxu0 0.0
    %88 = vmatpush1.msra.mxu0 0.0
    %89 = vmatprep.subr.mxu0 0.0
    %90 = vmatpush1.msra.mxu0 0.0
    %91 = vmatprep.subr.mxu0 0.0
    %92 = vmatpush1.msra.mxu0 0.0
    %93 = vmatprep.subr.mxu0 0.0
    %94 = vmatpush1.msra.mxu0 0.0
    %95 = vmatprep.subr.mxu0 0.0
    %96 = vmatpush1.msra.mxu0 0.0
    %97 = vmatprep.subr.mxu0 0.0
    %98 = vmatpush1.msra.mxu0 0.0
    %99 = vmatprep.subr.mxu0 0.0
    %100 = vmatpush1.msra.mxu0 0.0
    %101 = vmatprep.subr.mxu0 0.0
    %102 = vmatpush1.msra.mxu0 0.0
    %103 = vmatprep.subr.mxu0 0.0
    %104 = vmatpush1.msra.mxu0 0.0
    %105 = vmatprep.subr.mxu0 0.0
    %106 = vmatpush1.msra.mxu0 0.0
    %107 = vmatprep.subr.mxu0 0.0
    %108 = vmatpush1.msra.mxu0 0.0
    %109 = vmatprep.subr.mxu0 0.0
    %110 = vmatpush1.msra.mxu0 0.0
    %111 = vmatprep.subr.mxu0 0.0
    %112 = vmatpush1.msra.mxu0 0.0
    %113 = vmatprep.subr.mxu0 0.0
    %114 = vmatpush1.msra.mxu0 0.0
    %115 = vmatprep.subr.mxu0 0.0
    %116 = vmatpush1.msra.mxu0 0.0
    %117 = vmatprep.subr.mxu0 0.0
    %118 = vmatpush1.msra.mxu0 0.0
    %119 = vmatprep.subr.mxu0 0.0
    %120 = vmatpush1.msra.mxu0 0.0
    %121 = vmatprep.subr.mxu0 0.0
    %122 = vmatpush1.msra.mxu0 0.0
    %123 = vmatprep.subr.mxu0 0.0
    %124 = vmatpush1.msra.mxu0 0.0
    %125 = vmatprep.subr.mxu0 0.0
    %126 = vmatpush1.msra.mxu0 0.0
    %127 = vmatprep.subr.mxu0 0.0
    %128 = vmatpush1.msra.mxu0 0.0
    %129 = vmatprep.subr.mxu0 0.0
    %130 = vmatpush1.msra.mxu0 0.0
    %131 = vmatprep.subr.mxu0 0.0
    %132 = vmatpush1.msra.mxu0 0.0
    %133 = vmatprep.subr.mxu0 0.0
    %134 = vmatpush1.msra.mxu0 0.0
    %135 = vmatprep.mubr.f32.mxu0 0.0
    %136 = vmatmul.mubr.f32.gmra.mrb[0].mxu0 %v56
    %v137 = vpop.f32.mrb[0].mxu0
    %v138 = vadd.f32 %v52, %v137
    %v139 = vpop.f32.mrb[0].mxu0
    %v140 = vadd.f32 %v52, %v139
    %141 = vdwg.mxu0
    %142 = vmatprep.subr.mxu0 %v31
    %143 = vmatpush1.msra.mxu0 %v30
    %144 = vmatprep.subr.mxu0 %v35
    %145 = vmatpush1.msra.mxu0 %v34
    %146 = vmatprep.subr.mxu0 %v39
    %147 = vmatpush1.msra.mxu0 %v38
    %148 = vmatprep.subr.mxu0 %v43
    %149 = vmatpush1.msra.mxu0 %v42
    %150 = vmatprep.subr.mxu0 %v69
    %151 = vmatpush1.msra.mxu0 %v66
    %152 = vmatprep.subr.mxu0 0.0
    %153 = vmatpush1.msra.mxu0 0.0
    %154 = vmatprep.subr.mxu0 0.0
    %155 = vmatpush1.msra.mxu0 0.0
    %156 = vmatprep.subr.mxu0 0.0
    %157 = vmatpush1.msra.mxu0 0.0
    %158 = vmatprep.subr.mxu0 0.0
    %159 = vmatpush1.msra.mxu0 0.0
    %160 = vmatprep.subr.mxu0 0.0
    %161 = vmatpush1.msra.mxu0 0.0
    %162 = vmatprep.subr.mxu0 0.0
    %163 = vmatpush1.msra.mxu0 0.0
    %164 = vmatprep.subr.mxu0 0.0
    %165 = vmatpush1.msra.mxu0 0.0
    %166 = vmatprep.subr.mxu0 0.0
    %167 = vmatpush1.msra.mxu0 0.0
    %168 = vmatprep.subr.mxu0 0.0
    %169 = vmatpush1.msra.mxu0 0.0
    %170 = vmatprep.subr.mxu0 0.0
    %171 = vmatpush1.msra.mxu0 0.0
    %172 = vmatprep.subr.mxu0 0.0
    %173 = vmatpush1.msra.mxu0 0.0
    %174 = vmatprep.subr.mxu0 0.0
    %175 = vmatpush1.msra.mxu0 0.0
    %176 = vmatprep.subr.mxu0 0.0
    %177 = vmatpush1.msra.mxu0 0.0
    %178 = vmatprep.subr.mxu0 0.0
    %179 = vmatpush1.msra.mxu0 0.0
    %180 = vmatprep.subr.mxu0 0.0
    %181 = vmatpush1.msra.mxu0 0.0
    %182 = vmatprep.subr.mxu0 0.0
    %183 = vmatpush1.msra.mxu0 0.0
    %184 = vmatprep.subr.mxu0 0.0
    %185 = vmatpush1.msra.mxu0 0.0
    %186 = vmatprep.subr.mxu0 0.0
    %187 = vmatpush1.msra.mxu0 0.0
    %188 = vmatprep.subr.mxu0 0.0
    %189 = vmatpush1.msra.mxu0 0.0
    %190 = vmatprep.subr.mxu0 0.0
    %191 = vmatpush1.msra.mxu0 0.0
    %192 = vmatprep.subr.mxu0 0.0
    %193 = vmatpush1.msra.mxu0 0.0
    %194 = vmatprep.subr.mxu0 0.0
    %195 = vmatpush1.msra.mxu0 0.0
    %196 = vmatprep.subr.mxu0 0.0
    %197 = vmatpush1.msra.mxu0 0.0
    %198 = vmatprep.subr.mxu0 0.0
    %199 = vmatpush1.msra.mxu0 0.0
    %200 = vmatprep.subr.mxu0 0.0
    %201 = vmatpush1.msra.mxu0 0.0
    %202 = vmatprep.subr.mxu0 0.0
    %203 = vmatpush1.msra.mxu0 0.0
    %204 = vmatprep.subr.mxu0 0.0
    %205 = vmatpush1.msra.mxu0 0.0
    %206 = vmatprep.mubr.f32.mxu0 0.0
    %207 = vmatmul.mubr.f32.gmra.mrb[0].mxu0 %v56
    %v208 = vpop.f32.mrb[0].mxu0
    %v209 = vadd.f32 %v52, %v208
    %v210 = vpop.f32.mrb[0].mxu0
    %v211 = vadd.f32 %v52, %v210
    %212 = vdwg.mxu0
    %v213 = vmax.f32 %v138, 0.0
    %v214 = vmax.f32 %v140, 0.0
    %v215 = vmax.f32 %v209, 0.0
    %v216 = vmax.f32 %v211, 0.0
    %v217 = vmax.f32 %v213, %v214
    %v218 = vmax.f32 %v215, %v216
    %v219 = vmax.f32 %v217, %v218
    %v221 = vrot.slane %v219, 1
    %222 = vrot.lane.b32.xlu0 %v221, 64
    %v223 = vpop.permute.xlu0 %222
    %v225 = vrot.slane %v219, 2
    %v227 = vrot.slane %v219, 3
    %228 = vrot.lane.b32.xlu0 %v227, 64
    %v229 = vpop.permute.xlu0 %228
    %v231 = vrot.slane %v219, 4
    %v233 = vrot.slane %v219, 5
    %234 = vrot.lane.b32.xlu0 %v233, 64
    %v235 = vpop.permute.xlu0 %234
    %v237 = vrot.slane %v219, 6
    %v239 = vrot.slane %v219, 7
    %240 = vrot.lane.b32.xlu0 %v239, 64
    %v241 = vpop.permute.xlu0 %240
    %vm243 = vcmask 523264
    %v244 = vsel %vm243, %v219, %v223
    %v245 = vsel %vm243, %v225, %v229
    %v246 = vsel %vm243, %v231, %v235
    %v247 = vsel %vm243, %v237, %v241
    %248 = vrot.lane.b32.xlu0 %v219, 64
    %v249 = vpop.permute.xlu0 %248
    %252 = vrot.lane.b32.xlu0 %v225, 64
    %v253 = vpop.permute.xlu0 %252
    %256 = vrot.lane.b32.xlu0 %v231, 64
    %v257 = vpop.permute.xlu0 %256
    %260 = vrot.lane.b32.xlu0 %v237, 64
    %v261 = vpop.permute.xlu0 %260
    %v264 = vsel %vm243, %v249, %v221
    %v265 = vsel %vm243, %v253, %v227
    %v266 = vsel %vm243, %v257, %v233
    %v267 = vsel %vm243, %v261, %v239
    %v272 = vrot.slane %v264, 7
    %v273 = vrot.slane %v265, 7
    %v274 = vrot.slane %v266, 7
    %v275 = vrot.slane %v267, 7
    %vm280 = vcmask 1040384
    %v281 = vsel %vm280, %v244, %v272
    %v282 = vsel %vm280, %v245, %v273
    %v283 = vsel %vm280, %v246, %v274
    %v284 = vsel %vm280, %v247, %v275
    %v285 = vld [vmem:[%s3] sm:$0xff]
    %v286 = vld [vmem:[%s3 + $0x8] sm:$0xff]
    %v287 = vld [vmem:[%s3 + $0x10] sm:$0xff]
    %v288 = vld [vmem:[%s3 + $0x18] sm:$0xff]
    %v289 = vld [vmem:[%s3 + $0x20] sm:$0xff]
    %v290 = vld [vmem:[%s3 + $0x28] sm:$0xff]
    %v291 = vld [vmem:[%s3 + $0x30] sm:$0xff]
    %v292 = vld [vmem:[%s3 + $0x38] sm:$0xff]
    %v293 = vld [vmem:[%s3 + $0x40] sm:$0xff]
    %v294 = vld [vmem:[%s3 + $0x48] sm:$0xff]
    %v295 = vld [vmem:[%s3 + $0x50] sm:$0xff]
    %v296 = vld [vmem:[%s3 + $0x58] sm:$0xff]
    %v297 = vld [vmem:[%s3 + $0x60] sm:$0xff]
    %v298 = vld [vmem:[%s3 + $0x68] sm:$0xff]
    %v299 = vld [vmem:[%s3 + $0x70] sm:$0xff]
    %v300 = vld [vmem:[%s3 + $0x78] sm:$0xff]
    %v301 = vld [vmem:[%s3 + $0x80] sm:$0xff]
    %v302 = vld [vmem:[%s3 + $0x88] sm:$0xff]
    %v303 = vld [vmem:[%s3 + $0x90] sm:$0xff]
    %v304 = vld [vmem:[%s3 + $0x98] sm:$0xff]
    %v305 = vld [vmem:[%s3 + $0xa0] sm:$0xff]
    %v306 = vld [vmem:[%s3 + $0xa8] sm:$0xff]
    %v307 = vld [vmem:[%s3 + $0xb0] sm:$0xff]
    %v308 = vld [vmem:[%s3 + $0xb8] sm:$0xff]
    %v309 = vld [vmem:[%s3 + $0xc0] sm:$0xff]
    %v310 = vld [vmem:[%s3 + $0xc8] sm:$0xff]
    %v311 = vld [vmem:[%s3 + $0xd0] sm:$0xff]
    %v312 = vld [vmem:[%s3 + $0xd8] sm:$0xff]
    %v313 = vld [vmem:[%s3 + $0xe0] sm:$0xff]
    %v314 = vld [vmem:[%s3 + $0xe8] sm:$0xff]
    %v315 = vld [vmem:[%s3 + $0xf0] sm:$0xff]
    %v316 = vld [vmem:[%s3 + $0xf8] sm:$0xff]
    %v317 = vld [vmem:[%s3 + $0x100] sm:$0xff]
    %v318 = vld [vmem:[%s3 + $0x108] sm:$0xff]
    %v319 = vld [vmem:[%s3 + $0x110] sm:$0xff]
    %v320 = vld [vmem:[%s3 + $0x118] sm:$0xff]
    %v321 = vld [vmem:[%s3 + $0x120] sm:$0xff]
    %v322 = vld [vmem:[%s3 + $0x128] sm:$0xff]
    %v323 = vld [vmem:[%s3 + $0x130] sm:$0xff]
    %v324 = vld [vmem:[%s3 + $0x138] sm:$0xff]
    %v325 = vld [vmem:[%s3 + $0x140] sm:$0xff]
    %v326 = vld [vmem:[%s3 + $0x148] sm:$0xff]
    %v327 = vld [vmem:[%s3 + $0x150] sm:$0xff]
    %v328 = vld [vmem:[%s3 + $0x158] sm:$0xff]
    %v329 = vld [vmem:[%s3 + $0x160] sm:$0xff]
    %v330 = vld [vmem:[%s3 + $0x168] sm:$0xff]
    %v331 = vld [vmem:[%s3 + $0x170] sm:$0xff]
    %v332 = vld [vmem:[%s3 + $0x178] sm:$0xff]
    %v333 = vld [vmem:[%s3 + $0x180] sm:$0xff]
    %v334 = vld [vmem:[%s3 + $0x188] sm:$0xff]
    %v335 = vld [vmem:[%s3 + $0x190] sm:$0xff]
    %v336 = vld [vmem:[%s3 + $0x198] sm:$0xff]
    %v337 = vld [vmem:[%s3 + $0x1a0] sm:$0xff]
    %v338 = vld [vmem:[%s3 + $0x1a8] sm:$0xff]
    %v339 = vld [vmem:[%s3 + $0x1b0] sm:$0xff]
    %v340 = vld [vmem:[%s3 + $0x1b8] sm:$0xff]
    %v341 = vld [vmem:[%s3 + $0x1c0] sm:$0xff]
    %v342 = vld [vmem:[%s3 + $0x1c8] sm:$0xff]
    %v343 = vld [vmem:[%s3 + $0x1d0] sm:$0xff]
    %v344 = vld [vmem:[%s3 + $0x1d8] sm:$0xff]
    %v345 = vld [vmem:[%s3 + $0x1e0] sm:$0xff]
    %v346 = vld [vmem:[%s3 + $0x1e8] sm:$0xff]
    %v347 = vld [vmem:[%s3 + $0x1f0] sm:$0xff]
    %v348 = vld [vmem:[%s3 + $0x1f8] sm:$0xff]
    %v349 = vld [vmem:[%s4] sm:$0x1]
    %v351 = vlaneseq
    %v352 = vshrl.u32 %v351, 7
    %v353 = vsub.s32 0, %v352
    %v354 = vrot.slane %v349, %v353
    %356 = vmatprep.subr.mxu0 0.0
    %357 = vmatpush1.msra.mxu0 %v285
    %358 = vmatprep.subr.mxu0 0.0
    %359 = vmatpush1.msra.mxu0 %v286
    %360 = vmatprep.subr.mxu0 0.0
    %361 = vmatpush1.msra.mxu0 %v287
    %362 = vmatprep.subr.mxu0 0.0
    %363 = vmatpush1.msra.mxu0 %v288
    %364 = vmatprep.subr.mxu0 0.0
    %365 = vmatpush1.msra.mxu0 %v289
    %366 = vmatprep.subr.mxu0 0.0
    %367 = vmatpush1.msra.mxu0 %v290
    %368 = vmatprep.subr.mxu0 0.0
    %369 = vmatpush1.msra.mxu0 %v291
    %370 = vmatprep.subr.mxu0 0.0
    %371 = vmatpush1.msra.mxu0 %v292
    %372 = vmatprep.subr.mxu0 0.0
    %373 = vmatpush1.msra.mxu0 %v293
    %374 = vmatprep.subr.mxu0 0.0
    %375 = vmatpush1.msra.mxu0 %v294
    %376 = vmatprep.subr.mxu0 0.0
    %377 = vmatpush1.msra.mxu0 %v295
    %378 = vmatprep.subr.mxu0 0.0
    %379 = vmatpush1.msra.mxu0 %v296
    %380 = vmatprep.subr.mxu0 0.0
    %381 = vmatpush1.msra.mxu0 %v297
    %382 = vmatprep.subr.mxu0 0.0
    %383 = vmatpush1.msra.mxu0 %v298
    %384 = vmatprep.subr.mxu0 0.0
    %385 = vmatpush1.msra.mxu0 %v299
    %386 = vmatprep.subr.mxu0 0.0
    %387 = vmatpush1.msra.mxu0 %v300
    %388 = vmatprep.subr.mxu0 0.0
    %389 = vmatpush1.msra.mxu0 %v301
    %390 = vmatprep.subr.mxu0 0.0
    %391 = vmatpush1.msra.mxu0 %v302
    %392 = vmatprep.subr.mxu0 0.0
    %393 = vmatpush1.msra.mxu0 %v303
    %394 = vmatprep.subr.mxu0 0.0
    %395 = vmatpush1.msra.mxu0 %v304
    %396 = vmatprep.subr.mxu0 0.0
    %397 = vmatpush1.msra.mxu0 %v305
    %398 = vmatprep.subr.mxu0 0.0
    %399 = vmatpush1.msra.mxu0 %v306
    %400 = vmatprep.subr.mxu0 0.0
    %401 = vmatpush1.msra.mxu0 %v307
    %402 = vmatprep.subr.mxu0 0.0
    %403 = vmatpush1.msra.mxu0 %v308
    %404 = vmatprep.subr.mxu0 0.0
    %405 = vmatpush1.msra.mxu0 %v309
    %406 = vmatprep.subr.mxu0 0.0
    %407 = vmatpush1.msra.mxu0 %v310
    %408 = vmatprep.subr.mxu0 0.0
    %409 = vmatpush1.msra.mxu0 %v311
    %410 = vmatprep.subr.mxu0 0.0
    %411 = vmatpush1.msra.mxu0 %v312
    %412 = vmatprep.subr.mxu0 0.0
    %413 = vmatpush1.msra.mxu0 %v313
    %414 = vmatprep.subr.mxu0 0.0
    %415 = vmatpush1.msra.mxu0 %v314
    %416 = vmatprep.subr.mxu0 0.0
    %417 = vmatpush1.msra.mxu0 %v315
    %418 = vmatprep.subr.mxu0 0.0
    %419 = vmatpush1.msra.mxu0 %v316
    %420 = vmatprep.mubr.f32.mxu0 %v282
    %421 = vmatmul.mubr.f32.gmra.mrb[0].mxu0 %v281
    %v422 = vpop.f32.mrb[0].mxu0
    %v423 = vadd.f32 %v354, %v422
    %v424 = vpop.f32.mrb[0].mxu0
    %425 = vdwg.mxu0
    %426 = vmatprep.subr.mxu0 0.0
    %427 = vmatpush1.msra.mxu0 %v317
    %428 = vmatprep.subr.mxu0 0.0
    %429 = vmatpush1.msra.mxu0 %v318
    %430 = vmatprep.subr.mxu0 0.0
    %431 = vmatpush1.msra.mxu0 %v319
    %432 = vmatprep.subr.mxu0 0.0
    %433 = vmatpush1.msra.mxu0 %v320
    %434 = vmatprep.subr.mxu0 0.0
    %435 = vmatpush1.msra.mxu0 %v321
    %436 = vmatprep.subr.mxu0 0.0
    %437 = vmatpush1.msra.mxu0 %v322
    %438 = vmatprep.subr.mxu0 0.0
    %439 = vmatpush1.msra.mxu0 %v323
    %440 = vmatprep.subr.mxu0 0.0
    %441 = vmatpush1.msra.mxu0 %v324
    %442 = vmatprep.subr.mxu0 0.0
    %443 = vmatpush1.msra.mxu0 %v325
    %444 = vmatprep.subr.mxu0 0.0
    %445 = vmatpush1.msra.mxu0 %v326
    %446 = vmatprep.subr.mxu0 0.0
    %447 = vmatpush1.msra.mxu0 %v327
    %448 = vmatprep.subr.mxu0 0.0
    %449 = vmatpush1.msra.mxu0 %v328
    %450 = vmatprep.subr.mxu0 0.0
    %451 = vmatpush1.msra.mxu0 %v329
    %452 = vmatprep.subr.mxu0 0.0
    %453 = vmatpush1.msra.mxu0 %v330
    %454 = vmatprep.subr.mxu0 0.0
    %455 = vmatpush1.msra.mxu0 %v331
    %456 = vmatprep.subr.mxu0 0.0
    %457 = vmatpush1.msra.mxu0 %v332
    %458 = vmatprep.subr.mxu0 0.0
    %459 = vmatpush1.msra.mxu0 %v333
    %460 = vmatprep.subr.mxu0 0.0
    %461 = vmatpush1.msra.mxu0 %v334
    %462 = vmatprep.subr.mxu0 0.0
    %463 = vmatpush1.msra.mxu0 %v335
    %464 = vmatprep.subr.mxu0 0.0
    %465 = vmatpush1.msra.mxu0 %v336
    %466 = vmatprep.subr.mxu0 0.0
    %467 = vmatpush1.msra.mxu0 %v337
    %468 = vmatprep.subr.mxu0 0.0
    %469 = vmatpush1.msra.mxu0 %v338
    %470 = vmatprep.subr.mxu0 0.0
    %471 = vmatpush1.msra.mxu0 %v339
    %472 = vmatprep.subr.mxu0 0.0
    %473 = vmatpush1.msra.mxu0 %v340
    %474 = vmatprep.subr.mxu0 0.0
    %475 = vmatpush1.msra.mxu0 %v341
    %476 = vmatprep.subr.mxu0 0.0
    %477 = vmatpush1.msra.mxu0 %v342
    %478 = vmatprep.subr.mxu0 0.0
    %479 = vmatpush1.msra.mxu0 %v343
    %480 = vmatprep.subr.mxu0 0.0
    %481 = vmatpush1.msra.mxu0 %v344
    %482 = vmatprep.subr.mxu0 0.0
    %483 = vmatpush1.msra.mxu0 %v345
    %484 = vmatprep.subr.mxu0 0.0
    %485 = vmatpush1.msra.mxu0 %v346
    %486 = vmatprep.subr.mxu0 0.0
    %487 = vmatpush1.msra.mxu0 %v347
    %488 = vmatprep.subr.mxu0 0.0
    %489 = vmatpush1.msra.mxu0 %v348
    %490 = vmatprep.mubr.f32.mxu0 %v284
    %491 = vmatmul.mubr.f32.gmra.mrb[0].mxu0 %v283
    %v492 = vpop.f32.mrb[0].mxu0
    %v493 = vadd.f32 %v423, %v492
    %v494 = vpop.f32.mrb[0].mxu0
    %495 = vdwg.mxu0
    %v496 = vmax.f32 %v493, 0.0
    %v497 = vld [vmem:[%s5] sm:$0xff]
    %v498 = vld [vmem:[%s5 + $0x8] sm:$0xff]
    %v499 = vld [vmem:[%s5 + $0x10] sm:$0xff]
    %v500 = vld [vmem:[%s5 + $0x18] sm:$0xff]
    %v501 = vld [vmem:[%s5 + $0x20] sm:$0xff]
    %v502 = vld [vmem:[%s5 + $0x28] sm:$0xff]
    %v503 = vld [vmem:[%s5 + $0x30] sm:$0xff]
    %v504 = vld [vmem:[%s5 + $0x38] sm:$0xff]
    %v505 = vld [vmem:[%s5 + $0x40] sm:$0xff]
    %v506 = vld [vmem:[%s5 + $0x48] sm:$0xff]
    %v507 = vld [vmem:[%s5 + $0x50] sm:$0xff]
    %v508 = vld [vmem:[%s5 + $0x58] sm:$0xff]
    %v509 = vld [vmem:[%s5 + $0x60] sm:$0xff]
    %v510 = vld [vmem:[%s5 + $0x68] sm:$0xff]
    %v511 = vld [vmem:[%s5 + $0x70] sm:$0xff]
    %v512 = vld [vmem:[%s5 + $0x78] sm:$0xff]
    %v513 = vld [vmem:[%s6] sm:$0x1]
    %v515 = vlaneseq
    %v516 = vshrl.u32 %v515, 7
    %v517 = vsub.s32 0, %v516
    %v518 = vrot.slane %v513, %v517
    %520 = vmatprep.subr.mxu0 0.0
    %521 = vmatpush1.msra.mxu0 %v497
    %522 = vmatprep.subr.mxu0 0.0
    %523 = vmatpush1.msra.mxu0 %v498
    %524 = vmatprep.subr.mxu0 0.0
    %525 = vmatpush1.msra.mxu0 %v499
    %526 = vmatprep.subr.mxu0 0.0
    %527 = vmatpush1.msra.mxu0 %v500
    %528 = vmatprep.subr.mxu0 0.0
    %529 = vmatpush1.msra.mxu0 %v501
    %530 = vmatprep.subr.mxu0 0.0
    %531 = vmatpush1.msra.mxu0 %v502
    %532 = vmatprep.subr.mxu0 0.0
    %533 = vmatpush1.msra.mxu0 %v503
    %534 = vmatprep.subr.mxu0 0.0
    %535 = vmatpush1.msra.mxu0 %v504
    %536 = vmatprep.subr.mxu0 0.0
    %537 = vmatpush1.msra.mxu0 %v505
    %538 = vmatprep.subr.mxu0 0.0
    %539 = vmatpush1.msra.mxu0 %v506
    %540 = vmatprep.subr.mxu0 0.0
    %541 = vmatpush1.msra.mxu0 %v507
    %542 = vmatprep.subr.mxu0 0.0
    %543 = vmatpush1.msra.mxu0 %v508
    %544 = vmatprep.subr.mxu0 0.0
    %545 = vmatpush1.msra.mxu0 %v509
    %546 = vmatprep.subr.mxu0 0.0
    %547 = vmatpush1.msra.mxu0 %v510
    %548 = vmatprep.subr.mxu0 0.0
    %549 = vmatpush1.msra.mxu0 %v511
    %550 = vmatprep.subr.mxu0 0.0
    %551 = vmatpush1.msra.mxu0 %v512
    %552 = vmatprep.subr.mxu0 0.0
    %553 = vmatpush1.msra.mxu0 0.0
    %554 = vmatprep.subr.mxu0 0.0
    %555 = vmatpush1.msra.mxu0 0.0
    %556 = vmatprep.subr.mxu0 0.0
    %557 = vmatpush1.msra.mxu0 0.0
    %558 = vmatprep.subr.mxu0 0.0
    %559 = vmatpush1.msra.mxu0 0.0
    %560 = vmatprep.subr.mxu0 0.0
    %561 = vmatpush1.msra.mxu0 0.0
    %562 = vmatprep.subr.mxu0 0.0
    %563 = vmatpush1.msra.mxu0 0.0
    %564 = vmatprep.subr.mxu0 0.0
    %565 = vmatpush1.msra.mxu0 0.0
    %566 = vmatprep.subr.mxu0 0.0
    %567 = vmatpush1.msra.mxu0 0.0
    %568 = vmatprep.subr.mxu0 0.0
    %569 = vmatpush1.msra.mxu0 0.0
    %570 = vmatprep.subr.mxu0 0.0
    %571 = vmatpush1.msra.mxu0 0.0
    %572 = vmatprep.subr.mxu0 0.0
    %573 = vmatpush1.msra.mxu0 0.0
    %574 = vmatprep.subr.mxu0 0.0
    %575 = vmatpush1.msra.mxu0 0.0
    %576 = vmatprep.subr.mxu0 0.0
    %577 = vmatpush1.msra.mxu0 0.0
    %578 = vmatprep.subr.mxu0 0.0
    %579 = vmatpush1.msra.mxu0 0.0
    %580 = vmatprep.subr.mxu0 0.0
    %581 = vmatpush1.msra.mxu0 0.0
    %582 = vmatprep.subr.mxu0 0.0
    %583 = vmatpush1.msra.mxu0 0.0
    %584 = vmatprep.mubr.f32.mxu0 0.0
    %585 = vmatmul.mubr.f32.gmra.mrb[0].mxu0 %v496
    %v586 = vpop.f32.mrb[0].mxu0
    %v587 = vadd.f32 %v518, %v586
    %v588 = vpop.f32.mrb[0].mxu0
    %589 = vdwg.mxu0
    %vm590 = vcmask 9216
    %591 = vst.msk [vmem:[#allocation2] sm:$0x3] %vm590, %v587
    // Predicated region
    $region30: #{model_forward.1} parent=1 // pred_check
      _
    $region31: #{model_forward.1} parent=1 // pred_check_branch
      %593 = sbr.rel (0) target = $region33
    $region32: #{model_forward.1} parent=1 // pred_region
      %s595 = ssub.s32 32, 32
      %596 = vsyncadd [#allocation3], %s595
      %s598 = sshll.u32 [#allocation2], 4
      %s599 = int_to_ptr.vmem [resolvable:$true] %s598
      %601 = dma.vmem_to_hbm [thread:$0]  %s599, 32, %s7, [#allocation3]
    $region33: #{model_forward.1} parent=1 // pred_fallthru
      _
    // Predicated region
    $region34: #{model_forward.1} parent=1 // pred_check
      _
    $region35: #{model_forward.1} parent=1 // pred_check_branch
      %603 = sbr.rel (0) target = $region37
    $region36: #{model_forward.1} parent=1 // pred_region
      %604 = dma.done [#allocation3], 32
    $region37: #{model_forward.1} parent=1 // pred_fallthru
      _
    %605 = vsyncpa [#allocation3], 1

</llo_original>
